<compile_context>
chip_gen: v5e
topology: v5e:2x2
jax: 0.10.0
libtpu: 0.0.40
codegen_flags: <defaults>
</compile_context>

<pallas_src>
import math

import jax
import jax.numpy as jnp
from jax.experimental import pallas as pl
from jax.experimental.pallas import tpu as pltpu


def _linear_attention_kernel(x_ref, wqk_ref, wv_t_ref, bqk_ref, bv_ref, o_ref):
    x = x_ref[...]                                     # (Bt, N, D) f32
    Bt, N, D = x.shape
    inv_n = 1.0 / N

    # AdaptiveAvgPool1d(1) over the sequence axis == mean over N.
    mean_x = jnp.mean(x, axis=1)                       # (Bt, D)

    # p[b,:] = (Q[b,:] @ Wk) / sqrt(D) with the Q projection and 1/sqrt(D)
    # folded into Wqk / bqk in the wrapper (one D x D matmul instead of two).
    p = jnp.dot(mean_x, wqk_ref[...],
                preferred_element_type=jnp.float32) + bqk_ref[...]       # (Bt, D)

    # scores[b,n] = K[b,n,:] . Q[b,:] / sqrt(D), up to an n-independent shift
    # (Q . bk / sqrt(D)) that softmax ignores.  Batched MXU contraction over D
    # -> no (Bt, N, D) broadcast temporary in VMEM.
    scores = jnp.einsum('bnd,bdk->bnk', x, p[:, :, None],
                        preferred_element_type=jnp.float32)[..., 0]      # (Bt, N)

    # Softmax over the sequence axis.  Exact reciprocal (approx=True would
    # violate the 1e-5 check against the reference).
    m = jnp.max(scores, axis=-1, keepdims=True)
    e = jnp.exp(scores - m)
    w = e * pl.reciprocal(jnp.sum(e, axis=-1, keepdims=True))            # (Bt, N)

    # (weights * V).mean(dim=1) == ((sum_n w*x) @ Wv.T + bv) / N because the
    # softmax weights sum to 1.  Batched MXU contraction over N.
    xw = jnp.einsum('bkn,bnd->bkd', w[:, None, :], x,
                    preferred_element_type=jnp.float32)[:, 0, :]         # (Bt, D)
    out = (jnp.dot(xw, wv_t_ref[...],
                   preferred_element_type=jnp.float32) + bv_ref[...]) * inv_n
    o_ref[...] = out                                                     # (Bt, D)


def _vmem_capacity_bytes():
    """Per-core VMEM capacity; conservative (v7x-sized) fallback if unknown."""
    try:
        cap = int(pltpu.get_tpu_info().vmem_capacity_bytes)
        if cap > 0:
            return cap
    except Exception:
        pass
    return 64 << 20


def _pick_b_tile(B, N, D, slab_budget_bytes, min_steps=4):
    """Batch-tile size (multiple of 8 unless it's the whole tiny batch).

    Keeps >= min_steps grid steps when B allows so BlockSpec double-buffering
    has work to overlap and both v7x TensorCores get a share of the grid, while
    capping the slab at the per-generation VMEM budget.
    """
    if B <= 8:
        return B
    # TODO(synk): add an N-tiled online-softmax path (second "arbitrary" grid
    # axis + m/l/acc scratch) for sequences where even an 8-row (N, D) slab
    # exceeds the per-generation VMEM budget.
    row_bytes = N * D * 4
    budget_rows = max(8, (slab_budget_bytes // row_bytes) // 8 * 8)
    if B >= 8 * min_steps:
        steps_cap = max(8, (B // min_steps) // 8 * 8)
    else:
        steps_cap = 8
    return min(budget_rows, steps_cap)


def linear_attention(x, wq, bq, wk, bk, wv, bv):
    B, N, D = x.shape
    x = x.astype(jnp.float32)

    # Generation-aware VMEM budgeting: ~1/4 of VMEM for one x slab (BlockSpec
    # double-buffers it), vmem limit at 3/4 of capacity.
    vmem_cap = _vmem_capacity_bytes()
    slab_budget = min(32 << 20, vmem_cap // 4)       # 32 MiB v5e/v6e, 16 MiB v7x
    vmem_limit = min(96 << 20, (vmem_cap * 3) // 4)  # 96 MiB v5e/v6e, 48 MiB v7x

    b_tile = _pick_b_tile(B, N, D, slab_budget)
    b_pad = pl.cdiv(B, b_tile) * b_tile
    if b_pad != B:
        x = jnp.pad(x, ((0, b_pad - B), (0, 0), (0, 0)))
    grid = (b_pad // b_tile,)

    # One-time wrapper folds (HIGHEST precision so the re-association stays at
    # f32 accuracy):  p = mean_x @ Wqk + bqk, out = xw @ Wv.T + bv.
    inv_sqrt_d = 1.0 / math.sqrt(D)
    hi = jax.lax.Precision.HIGHEST
    wqk = jnp.dot(wq.T, wk, precision=hi) * inv_sqrt_d                 # (D, D)
    bqk = jnp.dot(bq.reshape(1, D), wk, precision=hi) * inv_sqrt_d     # (1, D)
    wv_t = wv.T                                                        # (D, D)
    bv2 = bv.reshape(1, D)

    weight_spec = pl.BlockSpec((D, D), lambda b: (0, 0))
    bias_spec = pl.BlockSpec((1, D), lambda b: (0, 0))

    out = pl.pallas_call(
        _linear_attention_kernel,
        out_shape=jax.ShapeDtypeStruct((b_pad, D), jnp.float32),
        grid_spec=pltpu.PrefetchScalarGridSpec(
            num_scalar_prefetch=0,
            grid=grid,
            in_specs=[
                pl.BlockSpec((b_tile, N, D), lambda b: (b, 0, 0)),  # x slab
                weight_spec, weight_spec,                           # Wqk, Wv.T
                bias_spec, bias_spec,                               # bqk, bv
            ],
            out_specs=pl.BlockSpec((b_tile, D), lambda b: (b, 0)),
        ),
        compiler_params=pltpu.CompilerParams(
            dimension_semantics=("parallel",),
            vmem_limit_bytes=vmem_limit),
    )(x, wqk, wv_t, bqk, bv2)
    return out[:B] if b_pad != B else out


def linear_attention_ref(x, wq, bq, wk, bk, wv, bv):
    B, N, D = x.shape
    mean_x = jnp.mean(x, axis=1)                      # (B, D)
    q = mean_x @ wq.T + bq                            # (B, D)
    k = x @ wk.T + bk                                 # (B, N, D)
    v = x @ wv.T + bv                                 # (B, N, D)
    scores = jnp.einsum('bd,bnd->bn', q, k) / math.sqrt(D)
    weights = jax.nn.softmax(scores, axis=-1)[..., None]
    return jnp.mean(weights * v, axis=1)              # (B, D)


def _make_params(key, D):
    kwq, kbq, kwk, kbk, kwv, kbv = jax.random.split(key, 6)
    bound = 1.0 / math.sqrt(D)
    u = lambda k, shape: jax.random.uniform(k, shape, jnp.float32, -bound, bound)
    return (u(kwq, (D, D)), u(kbq, (D,)), u(kwk, (D, D)), u(kbk, (D,)),
            u(kwv, (D, D)), u(kbv, (D,)))


if __name__ == "__main__":
    key = jax.random.PRNGKey(0)
    # Second shape exercises the multi-step grid + batch-padding path.
    for (B, N, D) in [(2, 8, 32), (20, 16, 32)]:
        key, kx, kp = jax.random.split(key, 3)
        x = jax.random.normal(kx, (B, N, D), dtype=jnp.float32)
        params = _make_params(kp, D)

        out = jax.block_until_ready(linear_attention(x, *params))
        ref = linear_attention_ref(x, *params)

        assert out.shape == (B, D)
        assert jnp.allclose(out, ref, atol=1e-5, rtol=1e-5), \
            f"mismatch vs reference at {(B, N, D)}"
    print("KERNEL_OK")
</pallas_src>

<mosaic_0001>
module attributes {stable_mosaic.version = 11 : i64} {
  func.func @_linear_attention_kernel(%arg0: i32, %arg1: memref<2x8x32xf32, #tpu.memory_space<vmem>>, %arg2: memref<32x32xf32, #tpu.memory_space<vmem>>, %arg3: memref<32x32xf32, #tpu.memory_space<vmem>>, %arg4: memref<1x32xf32, #tpu.memory_space<vmem>>, %arg5: memref<1x32xf32, #tpu.memory_space<vmem>>, %arg6: memref<2x32xf32, #tpu.memory_space<vmem>>) attributes {dimension_semantics = [#tpu.dimension_semantics<parallel>], iteration_bounds = array<i64: 1>, scalar_prefetch = 0 : i64, scratch_operands = 0 : i64, tpu.core_type = #tpu.core_type<tc>, window_params = [{transform_indices = @transform_0, window_bounds = array<i64: 2, 8, 32>}, {pipeline_mode = #tpu.pipeline_mode<synchronous>, transform_indices = @transform_1, window_bounds = array<i64: 32, 32>}, {pipeline_mode = #tpu.pipeline_mode<synchronous>, transform_indices = @transform_2, window_bounds = array<i64: 32, 32>}, {pipeline_mode = #tpu.pipeline_mode<synchronous>, transform_indices = @transform_3, window_bounds = array<i64: 1, 32>}, {pipeline_mode = #tpu.pipeline_mode<synchronous>, transform_indices = @transform_4, window_bounds = array<i64: 1, 32>}, {transform_indices = @transform_5, window_bounds = array<i64: 2, 32>}]} {
    %c0 = arith.constant 0 : index
    %c0_0 = arith.constant 0 : index
    %c0_1 = arith.constant 0 : index
    %0 = vector.load %arg1[%c0, %c0_0, %c0_1] : memref<2x8x32xf32, #tpu.memory_space<vmem>>, vector<2x8x32xf32>
    %cst = arith.constant dense<0.000000e+00> : vector<2x32xf32>
    %1 = vector.multi_reduction <add>, %0, %cst [1] : vector<2x8x32xf32> to vector<2x32xf32>
    %cst_2 = arith.constant 8.000000e+00 : f32
    %2 = vector.broadcast %cst_2 : f32 to vector<2x32xf32>
    %3 = arith.divf %1, %2 : vector<2x32xf32>
    %c0_3 = arith.constant 0 : index
    %c0_4 = arith.constant 0 : index
    %4 = vector.load %arg2[%c0_3, %c0_4] : memref<32x32xf32, #tpu.memory_space<vmem>>, vector<32x32xf32>
    %cst_5 = arith.constant dense<0.000000e+00> : vector<2x32xf32>
    %5 = tpu.matmul %3, %4, %cst_5 {dimension_numbers = #tpu.dot_dimension_numbers<[1], [0], [0], [1], [0, 0, 1, 1], [], []>} : vector<2x32xf32>, vector<32x32xf32>, vector<2x32xf32> -> vector<2x32xf32>
    %c0_6 = arith.constant 0 : index
    %c0_7 = arith.constant 0 : index
    %6 = vector.load %arg4[%c0_6, %c0_7] : memref<1x32xf32, #tpu.memory_space<vmem>>, vector<1x32xf32>
    %7 = vector.broadcast %6 : vector<1x32xf32> to vector<2x32xf32>
    %8 = arith.addf %5, %7 : vector<2x32xf32>
    %9 = vector.shape_cast %8 : vector<2x32xf32> to vector<2x32x1xf32>
    "tpu.trace_start"() <{level = 10 : i32, message = "bnd,bdk->bnk"}> : () -> ()
    %cst_8 = arith.constant dense<0.000000e+00> : vector<2x8x1xf32>
    %10 = tpu.matmul %0, %9, %cst_8 {dimension_numbers = #tpu.dot_dimension_numbers<[2], [1], [1], [2], [0, 0, 0, 1, 1, 2], [0], [0]>} : vector<2x8x32xf32>, vector<2x32x1xf32>, vector<2x8x1xf32> -> vector<2x8x1xf32>
    "tpu.trace_stop"() : () -> ()
    %11 = vector.shape_cast %10 : vector<2x8x1xf32> to vector<2x8xf32>
    %cst_9 = arith.constant dense<0xFF800000> : vector<2xf32>
    %12 = vector.multi_reduction <maximumf>, %11, %cst_9 [1] : vector<2x8xf32> to vector<2xf32>
    %13 = vector.shape_cast %12 : vector<2xf32> to vector<2x1xf32>
    %14 = vector.broadcast %13 : vector<2x1xf32> to vector<2x8xf32>
    %15 = arith.subf %11, %14 : vector<2x8xf32>
    %16 = math.exp %15 : vector<2x8xf32>
    %cst_10 = arith.constant dense<0.000000e+00> : vector<2xf32>
    %17 = vector.multi_reduction <add>, %16, %cst_10 [1] : vector<2x8xf32> to vector<2xf32>
    %18 = vector.shape_cast %17 : vector<2xf32> to vector<2x1xf32>
    %19 = tpu.reciprocal %18 : vector<2x1xf32> -> vector<2x1xf32>
    %20 = vector.broadcast %19 : vector<2x1xf32> to vector<2x8xf32>
    %21 = arith.mulf %16, %20 : vector<2x8xf32>
    %22 = vector.shape_cast %21 : vector<2x8xf32> to vector<2x1x8xf32>
    "tpu.trace_start"() <{level = 10 : i32, message = "bkn,bnd->bkd"}> : () -> ()
    %cst_11 = arith.constant dense<0.000000e+00> : vector<2x1x32xf32>
    %23 = tpu.matmul %22, %0, %cst_11 {dimension_numbers = #tpu.dot_dimension_numbers<[2], [1], [1], [2], [0, 0, 0, 1, 1, 2], [0], [0]>} : vector<2x1x8xf32>, vector<2x8x32xf32>, vector<2x1x32xf32> -> vector<2x1x32xf32>
    "tpu.trace_stop"() : () -> ()
    %24 = vector.shape_cast %23 : vector<2x1x32xf32> to vector<2x32xf32>
    %c0_12 = arith.constant 0 : index
    %c0_13 = arith.constant 0 : index
    %25 = vector.load %arg3[%c0_12, %c0_13] : memref<32x32xf32, #tpu.memory_space<vmem>>, vector<32x32xf32>
    %cst_14 = arith.constant dense<0.000000e+00> : vector<2x32xf32>
    %26 = tpu.matmul %24, %25, %cst_14 {dimension_numbers = #tpu.dot_dimension_numbers<[1], [0], [0], [1], [0, 0, 1, 1], [], []>} : vector<2x32xf32>, vector<32x32xf32>, vector<2x32xf32> -> vector<2x32xf32>
    %c0_15 = arith.constant 0 : index
    %c0_16 = arith.constant 0 : index
    %27 = vector.load %arg5[%c0_15, %c0_16] : memref<1x32xf32, #tpu.memory_space<vmem>>, vector<1x32xf32>
    %28 = vector.broadcast %27 : vector<1x32xf32> to vector<2x32xf32>
    %29 = arith.addf %26, %28 : vector<2x32xf32>
    %cst_17 = arith.constant 1.250000e-01 : f32
    %30 = vector.broadcast %cst_17 : f32 to vector<2x32xf32>
    %31 = arith.mulf %29, %30 : vector<2x32xf32>
    %c0_18 = arith.constant 0 : index
    %c0_19 = arith.constant 0 : index
    %32 = vector.load %arg6[%c0_18, %c0_19] : memref<2x32xf32, #tpu.memory_space<vmem>>, vector<2x32xf32>
    tpu.vector_store %arg6[%c0_18, %c0_19], %31 {strides = array<i32>} : memref<2x32xf32, #tpu.memory_space<vmem>>, vector<2x32xf32>,
    return
  }
  func.func @transform_0(%arg0: i32) -> (i32, i32, i32) {
    %c0_i32 = arith.constant 0 : i32
    %c0_i32_0 = arith.constant 0 : i32
    %c0_i32_1 = arith.constant 0 : i32
    return %arg0, %c0_i32, %c0_i32_0 : i32, i32, i32
  }
  func.func @transform_1(%arg0: i32) -> (i32, i32) {
    %c0_i32 = arith.constant 0 : i32
    %c0_i32_0 = arith.constant 0 : i32
    %c0_i32_1 = arith.constant 0 : i32
    return %c0_i32, %c0_i32_0 : i32, i32
  }
  func.func @transform_2(%arg0: i32) -> (i32, i32) {
    %c0_i32 = arith.constant 0 : i32
    %c0_i32_0 = arith.constant 0 : i32
    %c0_i32_1 = arith.constant 0 : i32
    return %c0_i32, %c0_i32_0 : i32, i32
  }
  func.func @transform_3(%arg0: i32) -> (i32, i32) {
    %c0_i32 = arith.constant 0 : i32
    %c0_i32_0 = arith.constant 0 : i32
    %c0_i32_1 = arith.constant 0 : i32
    return %c0_i32, %c0_i32_0 : i32, i32
  }
  func.func @transform_4(%arg0: i32) -> (i32, i32) {
    %c0_i32 = arith.constant 0 : i32
    %c0_i32_0 = arith.constant 0 : i32
    %c0_i32_1 = arith.constant 0 : i32
    return %c0_i32, %c0_i32_0 : i32, i32
  }
  func.func @transform_5(%arg0: i32) -> (i32, i32) {
    %c0_i32 = arith.constant 0 : i32
    %c0_i32_0 = arith.constant 0 : i32
    return %arg0, %c0_i32 : i32, i32
  }
}

</mosaic_0001>

<llo_original>
// kernel: tpu_custom_call.1
$region0: #{tpu_custom_call.1}
  #allocation0 [shape = 'u32[]', space=smem, size = 0x4, offset = 0x4, fixed_abs, tag = 'smem constant byte address 0x4 - core index']
  #allocation1 [shape = 'u32[72,128]{1,0:T(1,128)}', space=vmem, size = 0x9000, scoped, tag = 'internal scratch']
  %s0 = inlined_call_operand.hbm [shape: f32[2,8,32], index: 0, kind: input, shape index: {}]
  %s1 = inlined_call_operand.hbm [shape: f32[32,32], index: 1, kind: input, shape index: {}]
  %s2 = inlined_call_operand.hbm [shape: f32[32,32], index: 2, kind: input, shape index: {}]
  %s3 = inlined_call_operand.vmem [shape: f32[1,32], index: 3, kind: input, shape index: {}]
  %s4 = inlined_call_operand.vmem [shape: f32[1,32], index: 4, kind: input, shape index: {}]
  %s5 = inlined_call_operand.hbm [shape: f32[2,32], index: 5, kind: output, shape index: {}]
  %s6 = sld [smem:[#allocation0]]
  $region42: #{tpu_custom_call.1} parent=0
    _
  %s8 = ssub.s32 1, %s6
  %s9 = scalar_select 0, %s8, %s6
  $region1: #{tpu_custom_call.1} parent=0
    #allocation2 [shape = 'u8[8192]{0}', space=vmem, size = 0x2000, scoped, tag = 'input window, operand 0, single buffered']
    #allocation3 [shape = 's32[1]{0}', space=sflag, size = 0x4, scoped, tag = 'scoped memory for tpu_custom_call.1']
    #allocation4 [shape = 's32[1]{0}', space=sflag, size = 0x4, scoped, tag = 'scoped memory for tpu_custom_call.1']
    #allocation5 [shape = 'u8[16384]{0}', space=vmem, size = 0x4000, scoped, tag = 'input window, operand 1, single buffered']
    #allocation6 [shape = 's32[1]{0}', space=sflag, size = 0x4, scoped, tag = 'scoped memory for tpu_custom_call.1']
    #allocation7 [shape = 'u8[16384]{0}', space=vmem, size = 0x4000, scoped, tag = 'input window, operand 2, single buffered']
    #allocation8 [shape = 'u8[1024]{0}', space=vmem, size = 0x400, scoped, tag = 'output window, operand 0, single buffered']
    %10 = vsyncpa [#allocation3], 0
    %11 = vsyncpa [#allocation6], 0
    %12 = vsyncpa [#allocation4], 0
    // Predicated region
    $region2: #{tpu_custom_call.1} parent=1 // pred_check
      _
    $region3: #{tpu_custom_call.1} parent=1 // pred_check_branch
      %14 = sbr.rel (0) target = $region5
    $region4: #{tpu_custom_call.1} parent=1 // pred_region
      %16 = vsyncadd [#allocation3], 0
      %s17 = sshll.u32 %s0, 4
      %s18 = int_to_ptr.hbm [resolvable:$true] %s17
      %s19 = sshll.u32 [#allocation2], 4
      %s20 = int_to_ptr.vmem [resolvable:$true] %s19
      %25 = dma.hbm_to_vmem [thread:$0]  %s18, 256, %s20, [#allocation3], 128, 128, 8
    $region5: #{tpu_custom_call.1} parent=1 // pred_fallthru
      _
    // Predicated region
    $region6: #{tpu_custom_call.1} parent=1 // pred_check
      _
    $region7: #{tpu_custom_call.1} parent=1 // pred_check_branch
      %27 = sbr.rel (0) target = $region9
    $region8: #{tpu_custom_call.1} parent=1 // pred_region
      %29 = vsyncadd [#allocation6], 0
      %s30 = sshll.u32 %s1, 4
      %s31 = int_to_ptr.hbm [resolvable:$true] %s30
      %s32 = sshll.u32 [#allocation5], 4
      %s33 = int_to_ptr.vmem [resolvable:$true] %s32
      %38 = dma.hbm_to_vmem [thread:$0]  %s31, 512, %s33, [#allocation6], 128, 128, 8
    $region9: #{tpu_custom_call.1} parent=1 // pred_fallthru
      _
    // Predicated region
    $region10: #{tpu_custom_call.1} parent=1 // pred_check
      _
    $region11: #{tpu_custom_call.1} parent=1 // pred_check_branch
      %40 = sbr.rel (0) target = $region13
    $region12: #{tpu_custom_call.1} parent=1 // pred_region
      %42 = vsyncadd [#allocation6], 0
      %s43 = sshll.u32 %s2, 4
      %s44 = int_to_ptr.hbm [resolvable:$true] %s43
      %s45 = sshll.u32 [#allocation7], 4
      %s46 = int_to_ptr.vmem [resolvable:$true] %s45
      %51 = dma.hbm_to_vmem [thread:$0]  %s44, 512, %s46, [#allocation6], 128, 128, 8
    $region13: #{tpu_custom_call.1} parent=1 // pred_fallthru
      _
    // Predicated region
    $region14: #{tpu_custom_call.1} parent=1 // pred_check
      _
    $region15: #{tpu_custom_call.1} parent=1 // pred_check_branch
      %53 = sbr.rel (0) target = $region17
    $region16: #{tpu_custom_call.1} parent=1 // pred_region
      _
    $region17: #{tpu_custom_call.1} parent=1 // pred_fallthru
      _
    // Predicated region
    $region18: #{tpu_custom_call.1} parent=1 // pred_check
      _
    $region19: #{tpu_custom_call.1} parent=1 // pred_check_branch
      %55 = sbr.rel (0) target = $region21
    $region20: #{tpu_custom_call.1} parent=1 // pred_region
      _
    $region21: #{tpu_custom_call.1} parent=1 // pred_fallthru
      _
    // Predicated region
    $region22: #{tpu_custom_call.1} parent=1 // pred_check
      _
    $region23: #{tpu_custom_call.1} parent=1 // pred_check_branch
      %57 = sbr.rel (0) target = $region25
    $region24: #{tpu_custom_call.1} parent=1 // pred_region
      %59 = dma.done [#allocation3], 256
    $region25: #{tpu_custom_call.1} parent=1 // pred_fallthru
      _
    // Predicated region
    $region26: #{tpu_custom_call.1} parent=1 // pred_check
      _
    $region27: #{tpu_custom_call.1} parent=1 // pred_check_branch
      %61 = sbr.rel (0) target = $region29
    $region28: #{tpu_custom_call.1} parent=1 // pred_region
      %63 = dma.done [#allocation6], 512
    $region29: #{tpu_custom_call.1} parent=1 // pred_fallthru
      _
    // Predicated region
    $region30: #{tpu_custom_call.1} parent=1 // pred_check
      _
    $region31: #{tpu_custom_call.1} parent=1 // pred_check_branch
      %65 = sbr.rel (0) target = $region33
    $region32: #{tpu_custom_call.1} parent=1 // pred_region
      %67 = dma.done [#allocation6], 512
    $region33: #{tpu_custom_call.1} parent=1 // pred_fallthru
      _
    %v68 = vld [vmem:[#allocation2] sm:$0xff]
    %v69 = vld [vmem:[#allocation2 + $0x8] sm:$0xff]
    %vm70 = vcmask 261120
    %v71 = vsel %vm70, %v68, 0.0
    %v72 = vrot.slane %v71, 4
    %v73 = vadd.f32 %v71, %v72
    %v74 = vrot.slane %v73, 2
    %v75 = vadd.f32 %v73, %v74
    %v76 = vrot.slane %v75, 1
    %v77 = vadd.f32 %v75, %v76
    %v78 = vsel %vm70, %v69, 0.0
    %v79 = vrot.slane %v78, 4
    %v80 = vadd.f32 %v78, %v79
    %v81 = vrot.slane %v80, 2
    %v82 = vadd.f32 %v80, %v81
    %v83 = vrot.slane %v82, 1
    %v84 = vadd.f32 %v82, %v83
    %v85 = vrcp.pop 8.0
    %v86 = vmul.f32 8.0, %v85
    %v87 = vsub.f32 1.0, %v86
    %v88 = vmul.f32 %v85, %v87
    %v89 = vadd.f32 %v85, %v88
    %vm90 = vweird.f32 %v85
    %v91 = vsel %vm90, %v85, %v89
    %v92 = vmul.f32 %v77, %v91
    %v93 = vmul.f32 %v84, %v91
    %v94 = vld [vmem:[#allocation5] sm:$0xff]
    %v95 = vld [vmem:[#allocation5 + $0x8] sm:$0xff]
    %v96 = vld [vmem:[#allocation5 + $0x10] sm:$0xff]
    %v97 = vld [vmem:[#allocation5 + $0x18] sm:$0xff]
    %v98 = vld [vmem:[%s3] sm:$0x1]
    %v100 = vperm.slane %v98, 0
    %vm104 = vcmask 1041409
    %v105 = vsel %vm104, %v93, %v92
    %v106 = vsel %vm70, %v105, 0
    %108 = vmatpush.msra.mxu0 0.0
    %109 = vmatpush.msra.mxu0 0.0
    %110 = vmatpush.msra.mxu0 0.0
    %111 = vmatpush.msra.mxu0 0.0
    %112 = vmatpush.msra.mxu0 0.0
    %113 = vmatpush.msra.mxu0 0.0
    %114 = vmatpush.msra.mxu0 0.0
    %115 = vmatpush.msra.mxu0 0.0
    %116 = vmatpush.msra.mxu0 0.0
    %117 = vmatpush.msra.mxu0 0.0
    %118 = vmatpush.msra.mxu0 0.0
    %119 = vmatpush.msra.mxu0 0.0
    %120 = vmatpush.msra.mxu0 %v97
    %121 = vmatpush.msra.mxu0 %v96
    %122 = vmatpush.msra.mxu0 %v95
    %123 = vmatpush.msra.mxu0 %v94
    %124 = vmatmul.f32.gmra.mxu0 %v106
    %v125 = vpop.f32.mrf.mxu0
    %v126 = vadd.f32 %v100, %v125
    %127 = vdwg.mxu0
    %v128 = vperm.slane %v126, 0
    %v129 = vlaneseq
    %v130 = vshrl.u32 %v129, 7
    %132 = vset.pattern.permute.xlu0 %v130
    %133 = vperm.xlu0 %132, %v128
    %v134 = vpop.permute.xlu0 %133
    %v135 = vlaneseq
    %v136 = vshrl.u32 %v135, 7
    %v137 = vadd.s32 %v136, 8
    %138 = vset.pattern.permute.xlu0 %v137
    %139 = vperm.xlu0 %138, %v128
    %v140 = vpop.permute.xlu0 %139
    %v141 = vlaneseq
    %v142 = vshrl.u32 %v141, 7
    %v143 = vadd.s32 %v142, 16
    %144 = vset.pattern.permute.xlu0 %v143
    %145 = vperm.xlu0 %144, %v128
    %v146 = vpop.permute.xlu0 %145
    %v147 = vlaneseq
    %v148 = vshrl.u32 %v147, 7
    %v149 = vadd.s32 %v148, 24
    %150 = vset.pattern.permute.xlu0 %v149
    %151 = vperm.xlu0 %150, %v128
    %v152 = vpop.permute.xlu0 %151
    %v153 = vperm.slane %v126, 1
    %v154 = vlaneseq
    %v155 = vshrl.u32 %v154, 7
    %157 = vset.pattern.permute.xlu0 %v155
    %158 = vperm.xlu0 %157, %v153
    %v159 = vpop.permute.xlu0 %158
    %v160 = vlaneseq
    %v161 = vshrl.u32 %v160, 7
    %v162 = vadd.s32 %v161, 8
    %163 = vset.pattern.permute.xlu0 %v162
    %164 = vperm.xlu0 %163, %v153
    %v165 = vpop.permute.xlu0 %164
    %v166 = vlaneseq
    %v167 = vshrl.u32 %v166, 7
    %v168 = vadd.s32 %v167, 16
    %169 = vset.pattern.permute.xlu0 %v168
    %170 = vperm.xlu0 %169, %v153
    %v171 = vpop.permute.xlu0 %170
    %v172 = vlaneseq
    %v173 = vshrl.u32 %v172, 7
    %v174 = vadd.s32 %v173, 24
    %175 = vset.pattern.permute.xlu0 %v174
    %176 = vperm.xlu0 %175, %v153
    %v177 = vpop.permute.xlu0 %176
    %v179 = vsel %vm70, %v68, 0
    %181 = vmatpush.msra.mxu0 0.0
    %182 = vmatpush.msra.mxu0 0.0
    %183 = vmatpush.msra.mxu0 0.0
    %184 = vmatpush.msra.mxu0 0.0
    %185 = vmatpush.msra.mxu0 0.0
    %186 = vmatpush.msra.mxu0 0.0
    %187 = vmatpush.msra.mxu0 0.0
    %188 = vmatpush.msra.mxu0 0.0
    %189 = vmatpush.msra.mxu0 0.0
    %190 = vmatpush.msra.mxu0 0.0
    %191 = vmatpush.msra.mxu0 0.0
    %192 = vmatpush.msra.mxu0 0.0
    %193 = vmatpush.msra.mxu0 %v152
    %194 = vmatpush.msra.mxu0 %v146
    %195 = vmatpush.msra.mxu0 %v140
    %196 = vmatpush.msra.mxu0 %v134
    %197 = vmatmul.f32.gmra.mxu0 %v179
    %v198 = vpop.f32.mrf.mxu0
    %v199 = vadd.f32 0.0, %v198
    %200 = vdwg.mxu0
    %v202 = vsel %vm70, %v69, 0
    %204 = vmatpush.msra.mxu0 0.0
    %205 = vmatpush.msra.mxu0 0.0
    %206 = vmatpush.msra.mxu0 0.0
    %207 = vmatpush.msra.mxu0 0.0
    %208 = vmatpush.msra.mxu0 0.0
    %209 = vmatpush.msra.mxu0 0.0
    %210 = vmatpush.msra.mxu0 0.0
    %211 = vmatpush.msra.mxu0 0.0
    %212 = vmatpush.msra.mxu0 0.0
    %213 = vmatpush.msra.mxu0 0.0
    %214 = vmatpush.msra.mxu0 0.0
    %215 = vmatpush.msra.mxu0 0.0
    %216 = vmatpush.msra.mxu0 %v177
    %217 = vmatpush.msra.mxu0 %v171
    %218 = vmatpush.msra.mxu0 %v165
    %219 = vmatpush.msra.mxu0 %v159
    %220 = vmatmul.f32.gmra.mxu0 %v202
    %v221 = vpop.f32.mrf.mxu0
    %v222 = vadd.f32 0.0, %v221
    %223 = vdwg.mxu0
    %226 = vset.pattern.permute.xlu0 0
    %227 = vperm.xlu0 %226, %v199
    %v228 = vpop.permute.xlu0 %227
    %229 = vset.pattern.permute.xlu0 0
    %230 = vperm.xlu0 %229, %v222
    %v231 = vpop.permute.xlu0 %230
    %v232 = vlaneseq
    %v233 = vand.u32 %v232, 127
    %v234 = vperm.slane %v228, %v233
    %v235 = vperm.slane %v231, %v233
    %v236 = vsel %vm104, %v235, %v234
    %vm238 = vcmask 58368
    %v239 = vsel %vm238, %v236, -inf
    %240 = vmax.xlane.f32.xlu0 %v239
    %v241 = vpop.xlane.xlu0 %240
    %v243 = vperm.slane %v241, 0
    %v244 = vperm.slane %v241, 1
    %v247 = vsub.f32 %v199, %v243
    %v248 = vsub.f32 %v222, %v244
    %v249 = vmul.f32 %v247, 1.442695
    %v250 = vpow.pop %v249
    %v251 = vmul.f32 %v248, 1.442695
    %v252 = vpow.pop %v251
    %255 = vset.pattern.permute.xlu0 0
    %256 = vperm.xlu0 %255, %v250
    %v257 = vpop.permute.xlu0 %256
    %258 = vset.pattern.permute.xlu0 0
    %259 = vperm.xlu0 %258, %v252
    %v260 = vpop.permute.xlu0 %259
    %v261 = vperm.slane %v257, %v233
    %v262 = vperm.slane %v260, %v233
    %v263 = vsel %vm104, %v262, %v261
    %v265 = vsel %vm238, %v263, 0.0
    %266 = vadd.xlane.f32.xlu0 %v265
    %v267 = vpop.xlane.xlu0 %266
    %v268 = vrcp.pop %v267
    %v269 = vmul.f32 %v267, %v268
    %v270 = vsub.f32 1.0, %v269
    %v271 = vmul.f32 %v268, %v270
    %v272 = vadd.f32 %v268, %v271
    %vm273 = vweird.f32 %v267
    %vm274 = vweird.f32 %v268
    %vm275 = vmor %vm273, %vm274
    %v276 = vsel %vm275, %v268, %v272
    %v277 = vand.u32 2147483647, %v267
    %vm278 = vcmp.eq.f32.partialorder %v277, 8.507059e+37
    %v279 = vand.u32 %v267, 2147483648
    %v280 = vor.u32 1.1754944e-38, %v279
    %v281 = vsel %vm278, %v280, %v276
    %v283 = vperm.slane %v281, 0
    %v284 = vperm.slane %v281, 1
    %v287 = vmul.f32 %v250, %v283
    %v288 = vmul.f32 %v252, %v284
    %290 = vset.pattern.permute.xlu0 0
    %291 = vperm.xlu0 %290, %v287
    %v292 = vpop.permute.xlu0 %291
    %v293 = vperm.slane %v292, %v233
    %vm294 = vcmask 64512
    %v295 = vsel %vm294, %v293, 0
    %297 = vmatpush.msra.mxu0 0.0
    %298 = vmatpush.msra.mxu0 0.0
    %299 = vmatpush.msra.mxu0 0.0
    %300 = vmatpush.msra.mxu0 0.0
    %301 = vmatpush.msra.mxu0 0.0
    %302 = vmatpush.msra.mxu0 0.0
    %303 = vmatpush.msra.mxu0 0.0
    %304 = vmatpush.msra.mxu0 0.0
    %305 = vmatpush.msra.mxu0 0.0
    %306 = vmatpush.msra.mxu0 0.0
    %307 = vmatpush.msra.mxu0 0.0
    %308 = vmatpush.msra.mxu0 0.0
    %309 = vmatpush.msra.mxu0 0.0
    %310 = vmatpush.msra.mxu0 0.0
    %311 = vmatpush.msra.mxu0 0.0
    %312 = vmatpush.msra.mxu0 %v68
    %313 = vmatmul.f32.gmra.mxu0 %v295
    %v314 = vpop.f32.mrf.mxu0
    %v315 = vadd.f32 0.0, %v314
    %316 = vdwg.mxu0
    %318 = vset.pattern.permute.xlu0 0
    %319 = vperm.xlu0 %318, %v288
    %v320 = vpop.permute.xlu0 %319
    %v321 = vperm.slane %v320, %v233
    %v322 = vsel %vm294, %v321, 0
    %324 = vmatpush.msra.mxu0 0.0
    %325 = vmatpush.msra.mxu0 0.0
    %326 = vmatpush.msra.mxu0 0.0
    %327 = vmatpush.msra.mxu0 0.0
    %328 = vmatpush.msra.mxu0 0.0
    %329 = vmatpush.msra.mxu0 0.0
    %330 = vmatpush.msra.mxu0 0.0
    %331 = vmatpush.msra.mxu0 0.0
    %332 = vmatpush.msra.mxu0 0.0
    %333 = vmatpush.msra.mxu0 0.0
    %334 = vmatpush.msra.mxu0 0.0
    %335 = vmatpush.msra.mxu0 0.0
    %336 = vmatpush.msra.mxu0 0.0
    %337 = vmatpush.msra.mxu0 0.0
    %338 = vmatpush.msra.mxu0 0.0
    %339 = vmatpush.msra.mxu0 %v69
    %340 = vmatmul.f32.gmra.mxu0 %v322
    %v341 = vpop.f32.mrf.mxu0
    %v342 = vadd.f32 0.0, %v341
    %343 = vdwg.mxu0
    %v344 = vld [vmem:[#allocation7] sm:$0xff]
    %v345 = vld [vmem:[#allocation7 + $0x8] sm:$0xff]
    %v346 = vld [vmem:[#allocation7 + $0x10] sm:$0xff]
    %v347 = vld [vmem:[#allocation7 + $0x18] sm:$0xff]
    %v348 = vld [vmem:[%s4] sm:$0x1]
    %v350 = vperm.slane %v348, 0
    %v354 = vrot.slane %v342, 7
    %v355 = vsel %vm104, %v354, %v315
    %v356 = vsel %vm70, %v355, 0
    %358 = vmatpush.msra.mxu0 0.0
    %359 = vmatpush.msra.mxu0 0.0
    %360 = vmatpush.msra.mxu0 0.0
    %361 = vmatpush.msra.mxu0 0.0
    %362 = vmatpush.msra.mxu0 0.0
    %363 = vmatpush.msra.mxu0 0.0
    %364 = vmatpush.msra.mxu0 0.0
    %365 = vmatpush.msra.mxu0 0.0
    %366 = vmatpush.msra.mxu0 0.0
    %367 = vmatpush.msra.mxu0 0.0
    %368 = vmatpush.msra.mxu0 0.0
    %369 = vmatpush.msra.mxu0 0.0
    %370 = vmatpush.msra.mxu0 %v347
    %371 = vmatpush.msra.mxu0 %v346
    %372 = vmatpush.msra.mxu0 %v345
    %373 = vmatpush.msra.mxu0 %v344
    %374 = vmatmul.f32.gmra.mxu0 %v356
    %v375 = vpop.f32.mrf.mxu0
    %v376 = vadd.f32 %v350, %v375
    %377 = vdwg.mxu0
    %v378 = vmul.f32 %v376, 0.125
    %vm379 = vcmask 254976
    %380 = vst.msk [vmem:[#allocation8] sm:$0x3] %vm379, %v378
    // Predicated region
    $region34: #{tpu_custom_call.1} parent=1 // pred_check
      _
    $region35: #{tpu_custom_call.1} parent=1 // pred_check_branch
      %382 = sbr.rel (0) target = $region37
    $region36: #{tpu_custom_call.1} parent=1 // pred_region
      %384 = vsyncadd [#allocation4], 0
      %s386 = sshll.u32 [#allocation8], 4
      %s387 = int_to_ptr.vmem [resolvable:$true] %s386
      %s388 = sshll.u32 %s5, 4
      %s389 = int_to_ptr.hbm [resolvable:$true] %s388
      %391 = dma.vmem_to_hbm [thread:$0]  %s387, 32, %s389, [#allocation4]
    $region37: #{tpu_custom_call.1} parent=1 // pred_fallthru
      _
    // Predicated region
    $region38: #{tpu_custom_call.1} parent=1 // pred_check
      _
    $region39: #{tpu_custom_call.1} parent=1 // pred_check_branch
      %393 = sbr.rel (0) target = $region41
    $region40: #{tpu_custom_call.1} parent=1 // pred_region
      %395 = dma.done [#allocation4], 32
    $region41: #{tpu_custom_call.1} parent=1 // pred_fallthru
      _
    %396 = vsyncpa [#allocation3], 1
    %397 = vsyncpa [#allocation6], 1
    %398 = vsyncpa [#allocation4], 1

</llo_original>
